<compile_context>
chip_gen: v7x
topology: tpu7x:2x2x1
jax: 0.10.0
libtpu: 0.0.40
codegen_flags: <defaults>
</compile_context>

<pallas_src>
import functools

import jax
import jax.numpy as jnp
from jax.experimental import pallas as pl
from jax.experimental.pallas import tpu as pltpu


def _ce2d_kernel(x_ref, t_ref, out_ref, *, hw, tl, needs_mask):
    """x_ref: (1, C, TL) logits tile, t_ref: (1, 1, TL) int32 targets tile,
    out_ref: (1, 1, 1, 1) f32 per-(image, pixel-tile) NLL partial sum."""
    x = x_ref[0].astype(jnp.float32)        # (C, TL)
    t = t_ref[0]                            # (1, TL) int32

    # Gather the target logit first (one-hot select over the leading class axis),
    # so the iota/compare/select temporaries die before the exp/log block is live.
    cls = jax.lax.broadcasted_iota(jnp.int32, x.shape, 0)                     # (C, TL)
    picked_x = jnp.sum(jnp.where(cls == t, x, 0.0), axis=0, keepdims=True)    # (1, TL)

    # Numerically-stable log-softmax over the class axis (leading axis -> pure
    # sublane/VPU work, no cross-lane XLU traffic).
    m = jnp.max(x, axis=0, keepdims=True)                                     # (1, TL)
    lse = jnp.log(jnp.sum(jnp.exp(x - m), axis=0, keepdims=True))             # (1, TL)

    per_pixel = lse - (picked_x - m)        # -log p[target], (1, TL)

    if needs_mask:
        # Lane-wise SELECT (not multiply-by-mask): garbage loaded past hw in the
        # partial last tile must not propagate into the sum.
        p = pl.program_id(1)
        pix = p * tl + jax.lax.broadcasted_iota(jnp.int32, per_pixel.shape, 1)
        per_pixel = jnp.where(pix < hw, per_pixel, 0.0)

    out_ref[...] = jnp.sum(per_pixel, axis=-1, keepdims=True).reshape(1, 1, 1, 1)


def cross_entropy_loss_2d(inputs, targets, size_average=True, tile_pixels=None):
    """inputs: (N, C, H, W) float logits (NCHW, like PyTorch); f32 or bf16.
    targets: (N, H, W) int class indices in [0, C)."""
    N, C, H, W = inputs.shape
    hw = H * W
    itemsize = jnp.dtype(inputs.dtype).itemsize

    # ---- generation-aware VMEM budget -> lane-dense pixel-tile size ----
    try:
        vmem_cap = int(pltpu.get_tpu_info().vmem_capacity_bytes)
    except Exception:
        vmem_cap = 64 * 1024 * 1024          # conservative fallback: v7x per-TC VMEM
    # ~3/8 of physical VMEM for the working set: ~24 MiB on v7x, 40 MiB on v5e/v6e.
    budget = min((vmem_cap * 3) // 8, 40 * 1024 * 1024)
    # Per pixel-column footprint: double-buffered logits + targets DMA tiles plus
    # ~5 (C, tl)-sized f32 temporaries the body materializes (x upcast, z, exp(z),
    # iota, select).  This — not just the input tile — is what bounds tl.
    bytes_per_px = 2 * C * itemsize + 2 * 4 + 5 * C * 4
    max_tl = max(128, budget // bytes_per_px)
    tl = max_tl if tile_pixels is None else min(int(tile_pixels), max_tl)
    tl = max(128, (tl // 128) * 128)         # lane-dense: multiple of 128
    if hw <= tl:
        tl = hw                              # single block spanning the full pixel axis
    n_ptiles = pl.cdiv(hw, tl)
    needs_mask = (hw % tl) != 0

    vmem_limit = int(min(vmem_cap, budget + 24 * 1024 * 1024))

    # Free, contiguous reshapes only (no HBM transpose pass).  Keep the caller's
    # logits dtype: bf16 in -> bf16 HBM reads, upcast happens in-kernel.
    x3d = inputs.reshape(N, C, hw)
    t3d = targets.reshape(N, 1, hw).astype(jnp.int32)

    denom = N * hw if size_average else 1

    partials = pl.pallas_call(
        functools.partial(_ce2d_kernel, hw=hw, tl=tl, needs_mask=needs_mask),
        out_shape=jax.ShapeDtypeStruct((N, n_ptiles, 1, 1), jnp.float32),
        grid_spec=pltpu.PrefetchScalarGridSpec(
            num_scalar_prefetch=0,
            grid=(N, n_ptiles),
            in_specs=[
                pl.BlockSpec((1, C, tl), lambda n, p: (n, 0, p)),
                pl.BlockSpec((1, 1, tl), lambda n, p: (n, 0, p)),
            ],
            out_specs=pl.BlockSpec((1, 1, 1, 1), lambda n, p: (n, p, 0, 0)),
        ),
        compiler_params=pltpu.CompilerParams(
            # Every (n, p) step is independent -> both axes parallel, so v7x's two
            # TensorCores can split the pixel axis even when N == 1.
            dimension_semantics=("parallel", "parallel"),
            vmem_limit_bytes=vmem_limit,
        ),
    )(x3d, t3d)
    return jnp.sum(partials) / jnp.float32(denom)


def _reference_loss(inputs, targets, size_average=True):
    logp = jax.nn.log_softmax(inputs.astype(jnp.float32), axis=1)
    C = inputs.shape[1]
    onehot = jax.nn.one_hot(targets, C, axis=1, dtype=jnp.float32)
    nll = -jnp.sum(logp * onehot, axis=1)        # (N, H, W)
    return jnp.mean(nll) if size_average else jnp.sum(nll)


if __name__ == "__main__":
    key = jax.random.PRNGKey(0)
    k_x, k_t = jax.random.split(key)

    # small, module-consistent shapes (auto-sized single pixel tile per image)
    N, C, H, W = 2, 4, 16, 16
    inputs = jax.random.normal(k_x, (N, C, H, W), dtype=jnp.float32)
    targets = jax.random.randint(k_t, (N, H, W), 0, C, dtype=jnp.int32)

    loss = jax.block_until_ready(cross_entropy_loss_2d(inputs, targets))
    ref = _reference_loss(inputs, targets)
    assert jnp.allclose(loss, ref, rtol=1e-4, atol=1e-5), (loss, ref)

    # non-divisible pixel count + forced small tile exercises the tail-masked path
    k_x2, k_t2 = jax.random.split(k_t)
    N2, C2, H2, W2 = 1, 5, 10, 13
    inputs2 = jax.random.normal(k_x2, (N2, C2, H2, W2), dtype=jnp.float32)
    targets2 = jax.random.randint(k_t2, (N2, H2, W2), 0, C2, dtype=jnp.int32)
    loss2 = jax.block_until_ready(
        cross_entropy_loss_2d(inputs2, targets2, tile_pixels=128))
    ref2 = _reference_loss(inputs2, targets2)
    assert jnp.allclose(loss2, ref2, rtol=1e-4, atol=1e-5), (loss2, ref2)

    # bf16 logits path: HBM reads halved, in-kernel math still f32
    inputs3 = inputs.astype(jnp.bfloat16)
    loss3 = jax.block_until_ready(cross_entropy_loss_2d(inputs3, targets))
    ref3 = _reference_loss(inputs3, targets)
    assert jnp.allclose(loss3, ref3, rtol=1e-3, atol=1e-4), (loss3, ref3)

    print("KERNEL_OK")
</pallas_src>

<mosaic_0001>
module attributes {stable_mosaic.version = 11 : i64} {
  func.func @_ce2d_kernel(%arg0: i32, %arg1: i32, %arg2: memref<1x4x256xf32, #tpu.memory_space<vmem>>, %arg3: memref<1x1x256xi32, #tpu.memory_space<vmem>>, %arg4: memref<1x1x1x1xf32, #tpu.memory_space<vmem>>) attributes {dimension_semantics = [#tpu.dimension_semantics<parallel>, #tpu.dimension_semantics<parallel>], iteration_bounds = array<i64: 2, 1>, scalar_prefetch = 0 : i64, scratch_operands = 0 : i64, tpu.core_type = #tpu.core_type<tc>, window_params = [{transform_indices = @transform_0, window_bounds = array<i64: 1, 4, 256>}, {transform_indices = @transform_1, window_bounds = array<i64: 1, 1, 256>}, {transform_indices = @transform_2, window_bounds = array<i64: 1, 1, 1, 1>}]} {
    %c0 = arith.constant 0 : index
    %c0_0 = arith.constant 0 : index
    %c0_1 = arith.constant 0 : index
    %0 = vector.load %arg2[%c0, %c0_0, %c0_1] : memref<1x4x256xf32, #tpu.memory_space<vmem>>, vector<1x4x256xf32>
    %1 = vector.shape_cast %0 : vector<1x4x256xf32> to vector<4x256xf32>
    %c0_2 = arith.constant 0 : index
    %c0_3 = arith.constant 0 : index
    %c0_4 = arith.constant 0 : index
    %2 = vector.load %arg3[%c0_2, %c0_3, %c0_4] : memref<1x1x256xi32, #tpu.memory_space<vmem>>, vector<1x1x256xi32>
    %3 = vector.shape_cast %2 : vector<1x1x256xi32> to vector<1x256xi32>
    %4 = tpu.iota {dimensions = array<i32: 0>} : vector<4x256xi32>
    %5 = vector.broadcast %3 : vector<1x256xi32> to vector<4x256xi32>
    %6 = arith.cmpi eq, %4, %5 : vector<4x256xi32>
    %cst = arith.constant 0.000000e+00 : f32
    %7 = vector.broadcast %cst : f32 to vector<4x256xf32>
    %8 = arith.select %6, %1, %7 : vector<4x256xi1>, vector<4x256xf32>
    %cst_5 = arith.constant dense<0.000000e+00> : vector<256xf32>
    %9 = vector.multi_reduction <add>, %8, %cst_5 [0] : vector<4x256xf32> to vector<256xf32>
    %10 = vector.shape_cast %9 : vector<256xf32> to vector<1x256xf32>
    %cst_6 = arith.constant dense<0xFF800000> : vector<256xf32>
    %11 = vector.multi_reduction <maximumf>, %1, %cst_6 [0] : vector<4x256xf32> to vector<256xf32>
    %12 = vector.shape_cast %11 : vector<256xf32> to vector<1x256xf32>
    %13 = vector.broadcast %12 : vector<1x256xf32> to vector<4x256xf32>
    %14 = arith.subf %1, %13 : vector<4x256xf32>
    %15 = math.exp %14 : vector<4x256xf32>
    %cst_7 = arith.constant dense<0.000000e+00> : vector<256xf32>
    %16 = vector.multi_reduction <add>, %15, %cst_7 [0] : vector<4x256xf32> to vector<256xf32>
    %17 = vector.shape_cast %16 : vector<256xf32> to vector<1x256xf32>
    %18 = math.log %17 : vector<1x256xf32>
    %19 = arith.subf %10, %12 : vector<1x256xf32>
    %20 = arith.subf %18, %19 : vector<1x256xf32>
    %cst_8 = arith.constant dense<0.000000e+00> : vector<1xf32>
    %21 = vector.multi_reduction <add>, %20, %cst_8 [1] : vector<1x256xf32> to vector<1xf32>
    %22 = vector.shape_cast %21 : vector<1xf32> to vector<1x1xf32>
    %23 = vector.shape_cast %22 : vector<1x1xf32> to vector<1x1x1x1xf32>
    %c0_9 = arith.constant 0 : index
    %c0_10 = arith.constant 0 : index
    %c0_11 = arith.constant 0 : index
    %c0_12 = arith.constant 0 : index
    %24 = vector.load %arg4[%c0_9, %c0_10, %c0_11, %c0_12] : memref<1x1x1x1xf32, #tpu.memory_space<vmem>>, vector<1x1x1x1xf32>
    tpu.vector_store %arg4[%c0_9, %c0_10, %c0_11, %c0_12], %23 {strides = array<i32>} : memref<1x1x1x1xf32, #tpu.memory_space<vmem>>, vector<1x1x1x1xf32>,
    return
  }
  func.func @transform_0(%arg0: i32, %arg1: i32) -> (i32, i32, i32) {
    %c0_i32 = arith.constant 0 : i32
    %c0_i32_0 = arith.constant 0 : i32
    return %arg0, %c0_i32, %arg1 : i32, i32, i32
  }
  func.func @transform_1(%arg0: i32, %arg1: i32) -> (i32, i32, i32) {
    %c0_i32 = arith.constant 0 : i32
    %c0_i32_0 = arith.constant 0 : i32
    return %arg0, %c0_i32, %arg1 : i32, i32, i32
  }
  func.func @transform_2(%arg0: i32, %arg1: i32) -> (i32, i32, i32, i32) {
    %c0_i32 = arith.constant 0 : i32
    %c0_i32_0 = arith.constant 0 : i32
    %c0_i32_1 = arith.constant 0 : i32
    return %arg0, %arg1, %c0_i32, %c0_i32_0 : i32, i32, i32, i32
  }
}

</mosaic_0001>

<llo_original>
// kernel: tpu_custom_call.1
$region0: #{tpu_custom_call.1}
  #allocation0 [shape = 'u32[]', space=smem, size = 0x4, offset = 0x4, fixed_abs, tag = 'smem constant byte address 0x4 - core index']
  #allocation1 [shape = 'u32[144,128]{1,0:T(1,128)}', space=vmem, size = 0x12000, scoped, tag = 'internal scratch']
  %s0 = inlined_call_operand.hbm [shape: f32[2,4,256], index: 0, kind: input, shape index: {}]
  %s1 = inlined_call_operand.hbm [shape: s32[2,1,256], index: 1, kind: input, shape index: {}]
  %s2 = inlined_call_operand.vmem [shape: f32[2,1,1,1], index: 2, kind: output, shape index: {}]
  %s3 = sld [smem:[#allocation0]]
  $region49: #{tpu_custom_call.1} parent=0
    _
  %s5 = ssub.s32 1, %s3
  %s6 = scalar_select 0, %s5, %s3
  $region1: #{tpu_custom_call.1} parent=0
    #allocation2 [shape = 'u8[8192]{0}', space=vmem, size = 0x2000, scoped, tag = 'input window, operand 0']
    #allocation3 [shape = 's32[2]{0}', space=sflag, size = 0x8, scoped, tag = 'scoped memory for tpu_custom_call.1']
    #allocation4 [shape = 'u8[2048]{0}', space=vmem, size = 0x800, scoped, tag = 'input window, operand 1']
    #allocation5 [shape = 's32[2]{0}', space=sflag, size = 0x8, scoped, tag = 'scoped memory for tpu_custom_call.1']
    %7 = vsyncpa [#allocation3], 0
    %s8 = scalar_lea.sflag [#allocation3], 1
    %9 = vsyncpa %s8, 0
    %10 = vsyncpa [#allocation5], 0
    %s11 = scalar_lea.sflag [#allocation5], 1
    %12 = vsyncpa %s11, 0
    loop: start=0, step=1, limit=4
    $region2: #{tpu_custom_call.1} parent=1 // loop_pre_header
      _
    $region3: #{tpu_custom_call.1} parent=1 // loop_header
      %s14 = sphi 0, %s18
      %p15 = scmp.ge.s32.totalorder %s14, 4
      %s21 = sphi 0, %s33
      %s22 = sphi 0, %s29
      %s23 = sphi 0, %s21
      %s24 = sphi 0, %s22
      %s25 = sphi 0, %s23
      %s26 = sphi 0, %s24
      %s38 = sphi 0, %s40
      %s41 = sphi 0, %s38
      %s42 = sphi 0, %s41
      %s58 = sphi 0, %s42
      %s66 = sphi 0, %s68
      %s69 = sphi 0, %s66
      %s70 = sphi 0, %s69
      %s86 = sphi 0, %s70
      %s94 = sphi 0, %s96
      %s97 = sphi 0, %s94
      %s98 = sphi 0, %s97
      %s114 = sphi 0, %s98
    $region4: #{tpu_custom_call.1} parent=1 // loop_header_branch
      %17 = sbr.rel (%p15) target = $region8
    $region5: #{tpu_custom_call.1} parent=1 // loop_body
      %s19 = ssub.s32 %s14, 1
      %s20 = ssub.s32 %s14, 2
      %s27 = sadd.s32 1, %s22
      %p28 = scmp.ge.s32.totalorder %s27, 1
      %s29 = scalar_select %p28, 0, %s27
      %s30 = sadd.s32 1, %s21
      %s31 = scalar_select %p28, %s30, %s21
      %p32 = scmp.ge.s32.totalorder %s31, 2
      %s33 = scalar_select %p32, 0, %s31
      %s34 = ssub.s32 %s21, %s33
      %s35 = ssub.s32 %s22, %s29
      %s36 = sor.u32 %s34, %s35
      %p37 = scmp.eq.s32.totalorder %s36, 0
      %s39 = sadd.s32 %s38, 1
      %s40 = scalar_select %p37, %s38, %s39
      %p43 = pneg %p37
      %p44 = scmp.eq.s32.totalorder %s14, 1
      %p45 = por %p43, %p44
      %p46 = scmp.ne.s32.totalorder %s38, %s41
      %p47 = scmp.eq.s32.totalorder %s14, 0
      %p48 = por %p46, %p47
      %p49 = scmp.ne.s32.totalorder %s38, %s41
      %p50 = scmp.eq.s32.totalorder %s19, 1
      %p51 = por %p49, %p50
      %p52 = scmp.ne.s32.totalorder %s41, %s42
      %p53 = scmp.eq.s32.totalorder %s19, 0
      %p54 = por %p52, %p53
      %p55 = scmp.ne.s32.totalorder %s41, %s42
      %p56 = scmp.eq.s32.totalorder %s20, 1
      %p57 = por %p55, %p56
      %p59 = scmp.ne.s32.totalorder %s42, %s58
      %p60 = scmp.eq.s32.totalorder %s20, 0
      %p61 = por %p59, %p60
      %s62 = ssub.s32 %s21, %s33
      %s63 = ssub.s32 %s22, %s29
      %s64 = sor.u32 %s62, %s63
      %p65 = scmp.eq.s32.totalorder %s64, 0
      %s67 = sadd.s32 %s66, 1
      %s68 = scalar_select %p65, %s66, %s67
      %p71 = pneg %p65
      %p72 = scmp.eq.s32.totalorder %s14, 1
      %p73 = por %p71, %p72
      %p74 = scmp.ne.s32.totalorder %s66, %s69
      %p75 = scmp.eq.s32.totalorder %s14, 0
      %p76 = por %p74, %p75
      %p77 = scmp.ne.s32.totalorder %s66, %s69
      %p78 = scmp.eq.s32.totalorder %s19, 1
      %p79 = por %p77, %p78
      %p80 = scmp.ne.s32.totalorder %s69, %s70
      %p81 = scmp.eq.s32.totalorder %s19, 0
      %p82 = por %p80, %p81
      %p83 = scmp.ne.s32.totalorder %s69, %s70
      %p84 = scmp.eq.s32.totalorder %s20, 1
      %p85 = por %p83, %p84
      %p87 = scmp.ne.s32.totalorder %s70, %s86
      %p88 = scmp.eq.s32.totalorder %s20, 0
      %p89 = por %p87, %p88
      %s90 = ssub.s32 %s21, %s33
      %s91 = ssub.s32 %s22, %s29
      %s92 = sor.u32 %s90, %s91
      %p93 = scmp.eq.s32.totalorder %s92, 0
      %s95 = sadd.s32 %s94, 1
      %s96 = scalar_select %p93, %s94, %s95
      %p99 = pneg %p93
      %p100 = scmp.eq.s32.totalorder %s14, 1
      %p101 = por %p99, %p100
      %p102 = scmp.ne.s32.totalorder %s94, %s97
      %p103 = scmp.eq.s32.totalorder %s14, 0
      %p104 = por %p102, %p103
      %p105 = scmp.ne.s32.totalorder %s94, %s97
      %p106 = scmp.eq.s32.totalorder %s19, 1
      %p107 = por %p105, %p106
      %p108 = scmp.ne.s32.totalorder %s97, %s98
      %p109 = scmp.eq.s32.totalorder %s19, 0
      %p110 = por %p108, %p109
      %p111 = scmp.ne.s32.totalorder %s97, %s98
      %p112 = scmp.eq.s32.totalorder %s20, 1
      %p113 = por %p111, %p112
      %p115 = scmp.ne.s32.totalorder %s98, %s114
      %p116 = scmp.eq.s32.totalorder %s20, 0
      %p117 = por %p115, %p116
      %p118 = scmp.le.s32.totalorder 1, %s14
      %p119 = scmp.lt.s32.totalorder %s14, 3
      %p120 = pnand %p118, %p119
      %p121 = pneg %p120
      // Predicated region
      $region9: #{tpu_custom_call.1} parent=5 // pred_check
        _
      $region10: #{tpu_custom_call.1} parent=5 // pred_check_branch
        %123 = sbr.rel (%p120) target = $region12
      $region11: #{tpu_custom_call.1} parent=5 // pred_region
        %s124 = ssub.s32 %s14, 1
      $region12: #{tpu_custom_call.1} parent=5 // pred_fallthru
        _
      %p125 = scmp.lt.s32.totalorder %s14, 2
      // Predicated region
      $region13: #{tpu_custom_call.1} parent=5 // pred_check
        %p126 = pneg %p125
      $region14: #{tpu_custom_call.1} parent=5 // pred_check_branch
        %128 = sbr.rel (%p126) target = $region16
      $region15: #{tpu_custom_call.1} parent=5 // pred_region
        // Predicated region
        $region17: #{tpu_custom_call.1} parent=15 // pred_check
          %p129 = pneg %p48
        $region18: #{tpu_custom_call.1} parent=15 // pred_check_branch
          %131 = sbr.rel (%p129) target = $region20
        $region19: #{tpu_custom_call.1} parent=15 // pred_region
          %s132 = sand.u32 %s38, 1
          %s133 = scalar_lea.sflag [#allocation3], %s132
          %s134 = sand.u32 %s38, 1
          %s135 = smul.addr %s134, 8
          %s136 = scalar_lea.vmem [#allocation2], %s135
          %s137 = smul.u32 2, %s22
          %s139 = ssub.s32 128, 128
          %140 = vsyncadd %s133, %s139
          %s141 = smul.addr %s21, 2
          %s142 = sadd.s32 %s137, %s141
          %s143 = smul.addr %s142, 64
          %s144 = scalar_lea.hbm %s0, %s143
          %s146 = sshll.u32 %s136, 4
          %s147 = int_to_ptr.vmem [resolvable:$true] %s146
          %149 = dma.hbm_to_vmem [thread:$0]  %s144, 128, %s147, %s133
        $region20: #{tpu_custom_call.1} parent=15 // pred_fallthru
          _
        // Predicated region
        $region21: #{tpu_custom_call.1} parent=15 // pred_check
          %p150 = pneg %p76
        $region22: #{tpu_custom_call.1} parent=15 // pred_check_branch
          %152 = sbr.rel (%p150) target = $region24
        $region23: #{tpu_custom_call.1} parent=15 // pred_region
          %s153 = sand.u32 %s66, 1
          %s154 = scalar_lea.sflag [#allocation5], %s153
          %s155 = sand.u32 %s66, 1
          %s156 = smul.addr %s155, 2
          %s157 = scalar_lea.vmem [#allocation4], %s156
          %s158 = smul.u32 2, %s22
          %s160 = ssub.s32 32, 32
          %161 = vsyncadd %s154, %s160
          %s162 = smul.addr %s21, 2
          %s163 = sadd.s32 %s158, %s162
          %s164 = smul.addr %s163, 16
          %s165 = scalar_lea.hbm %s1, %s164
          %s167 = sshll.u32 %s157, 4
          %s168 = int_to_ptr.vmem [resolvable:$true] %s167
          %170 = dma.hbm_to_vmem [thread:$0]  %s165, 32, %s168, %s154
        $region24: #{tpu_custom_call.1} parent=15 // pred_fallthru
          _
      $region16: #{tpu_custom_call.1} parent=5 // pred_fallthru
        _
      %p171 = scmp.le.s32.totalorder 1, %s14
      %p172 = scmp.lt.s32.totalorder %s14, 3
      %p173 = pnand %p171, %p172
      %p174 = pneg %p173
      // Predicated region
      $region25: #{tpu_custom_call.1} parent=5 // pred_check
        _
      $region26: #{tpu_custom_call.1} parent=5 // pred_check_branch
        %176 = sbr.rel (%p173) target = $region28
      $region27: #{tpu_custom_call.1} parent=5 // pred_region
        %s177 = ssub.s32 %s14, 1
        %s178 = sand.u32 %s41, 1
        %s179 = scalar_lea.sflag [#allocation3], %s178
        %s180 = sand.u32 %s41, 1
        %s181 = smul.addr %s180, 8
        %s182 = scalar_lea.vmem [#allocation2], %s181
        // Predicated region
        $region29: #{tpu_custom_call.1} parent=27 // pred_check
          %p183 = pneg %p54
        $region30: #{tpu_custom_call.1} parent=27 // pred_check_branch
          %185 = sbr.rel (%p183) target = $region32
        $region31: #{tpu_custom_call.1} parent=27 // pred_region
          %186 = dma.done %s179, 128
        $region32: #{tpu_custom_call.1} parent=27 // pred_fallthru
          _
        %s187 = sand.u32 %s69, 1
        %s188 = scalar_lea.sflag [#allocation5], %s187
        %s189 = sand.u32 %s69, 1
        %s190 = smul.addr %s189, 2
        %s191 = scalar_lea.vmem [#allocation4], %s190
        // Predicated region
        $region33: #{tpu_custom_call.1} parent=27 // pred_check
          %p192 = pneg %p82
        $region34: #{tpu_custom_call.1} parent=27 // pred_check_branch
          %194 = sbr.rel (%p192) target = $region36
        $region35: #{tpu_custom_call.1} parent=27 // pred_region
          %195 = dma.done %s188, 32
        $region36: #{tpu_custom_call.1} parent=27 // pred_fallthru
          _
        %s196 = sand.u32 %s41, 1
        %s197 = scalar_lea.sflag [#allocation3], %s196
        %s198 = sand.u32 %s41, 1
        %s199 = smul.addr %s198, 8
        %s200 = scalar_lea.vmem [#allocation2], %s199
        %p201 = pneg %p54
        %p202 = pneg %p51
        %s203 = sand.u32 %s69, 1
        %s204 = scalar_lea.sflag [#allocation5], %s203
        %s205 = sand.u32 %s69, 1
        %s206 = smul.addr %s205, 2
        %s207 = scalar_lea.vmem [#allocation4], %s206
        %p208 = pneg %p82
        %p209 = pneg %p79
        %p210 = pneg %p110
        %p211 = pneg %p107
        %p212 = scmp.lt.s32.totalorder %s23, 1
        %s213 = scalar_select %p212, %s23, 1
        %p214 = scmp.lt.s32.totalorder %s24, 0
        %s215 = scalar_select %p214, %s24, 0
        %s216 = sadd.s32 %s215, %s213
        %s217 = scalar_lea.vmem %s2, %s216
        %s218 = smul.u32 2, %s24
        %s219 = smul.u32 2, %s24
        %p220 = scmp.lt.s32.totalorder %s23, 1
        %s221 = scalar_select %p220, %s23, 1
        %p222 = scmp.lt.s32.totalorder %s24, 0
        %s223 = scalar_select %p222, %s24, 0
        %s224 = sadd.s32 %s223, %s221
        %s225 = scalar_lea.vmem %s2, %s224
        %v226 = vld [vmem:[%s182] sm:$0xff]
        %v227 = vld [vmem:[%s191] sm:$0x3]
        %v228 = vlaneseq
        %v229 = vshrl.u32 %v228, 7
        %v230 = vlaneseq
        %v231 = vshrl.u32 %v230, 7
        %v232 = vsub.s32 0, %v231
        %v233 = vrot.slane %v227, %v232
        %v234 = vlaneseq
        %v235 = vshrl.u32 %v234, 7
        %v236 = vsub.s32 1, %v235
        %v237 = vrot.slane %v227, %v236
        %vm238 = vcmp.eq.s32.totalorder %v229, %v233
        %vm239 = vcmp.eq.s32.totalorder %v229, %v237
        %v241 = vcombine.high %v226, %v226
        %v243 = vsel %vm238, %v226, 0.0
        %v244 = vsel %vm239, %v241, 0.0
        %vm245 = vcmask 1043456
        %v246 = vsel %vm245, %v243, 0.0
        %v247 = vrot.slane %v246, 4
        %v248 = vadd.f32 %v246, %v247
        %v249 = vrot.slane %v248, 2
        %v250 = vadd.f32 %v248, %v249
        %v251 = vrot.slane %v250, 1
        %v252 = vadd.f32 %v250, %v251
        %v253 = vsel %vm245, %v244, 0.0
        %v254 = vrot.slane %v253, 4
        %v255 = vadd.f32 %v253, %v254
        %v256 = vrot.slane %v255, 2
        %v257 = vadd.f32 %v255, %v256
        %v258 = vrot.slane %v257, 1
        %v259 = vadd.f32 %v257, %v258
        %v260 = vsel %vm245, %v226, -inf
        %v261 = vrot.slane %v260, 4
        %v262 = vmax.f32 %v260, %v261
        %v263 = vrot.slane %v262, 2
        %v264 = vmax.f32 %v262, %v263
        %v265 = vrot.slane %v264, 1
        %v266 = vmax.f32 %v264, %v265
        %v267 = vsel %vm245, %v241, -inf
        %v268 = vrot.slane %v267, 4
        %v269 = vmax.f32 %v267, %v268
        %v270 = vrot.slane %v269, 2
        %v271 = vmax.f32 %v269, %v270
        %v272 = vrot.slane %v271, 1
        %v273 = vmax.f32 %v271, %v272
        %v276 = vcombine.low %v266, %v273
        %v278 = vsub.f32 %v226, %v276
        %v279 = vmul.f32 %v278, 1.442695
        %v280 = vpow.pop %v279
        %v282 = vcombine.high %v280, %v280
        %v284 = vsel %vm245, %v280, 0.0
        %v285 = vrot.slane %v284, 4
        %v286 = vadd.f32 %v284, %v285
        %v287 = vrot.slane %v286, 2
        %v288 = vadd.f32 %v286, %v287
        %v289 = vrot.slane %v288, 1
        %v290 = vadd.f32 %v288, %v289
        %v291 = vsel %vm245, %v282, 0.0
        %v292 = vrot.slane %v291, 4
        %v293 = vadd.f32 %v291, %v292
        %v294 = vrot.slane %v293, 2
        %v295 = vadd.f32 %v293, %v294
        %v296 = vrot.slane %v295, 1
        %v297 = vadd.f32 %v295, %v296
        %v298 = vlog2.pop %v290
        %v299 = vmul.f32 %v298, 0.6931472
        %v300 = vlog2.pop %v297
        %v301 = vmul.f32 %v300, 0.6931472
        %v302 = vsub.f32 %v252, %v266
        %v303 = vsub.f32 %v259, %v273
        %v304 = vsub.f32 %v299, %v302
        %v305 = vsub.f32 %v301, %v303
        %v306 = vadd.f32 %v304, %v305
        %307 = vadd.xlane.f32.xlu0 %v306
        %v308 = vpop.xlane.xlu0 %307
        %vm309 = vcmask 0
        %310 = vst.msk [vmem:[%s225] sm:$0x1] %vm309, %v308
        %p311 = scmp.lt.s32.totalorder %s23, 1
        %s312 = scalar_select %p311, %s23, 1
        %p313 = scmp.lt.s32.totalorder %s24, 0
        %s314 = scalar_select %p313, %s24, 0
        %s315 = sadd.s32 %s314, %s312
        %s316 = scalar_lea.vmem %s2, %s315
        // Predicated region
        $region37: #{tpu_custom_call.1} parent=27 // pred_check
          %p317 = pneg %p107
        $region38: #{tpu_custom_call.1} parent=27 // pred_check_branch
          %319 = sbr.rel (%p317) target = $region40
        $region39: #{tpu_custom_call.1} parent=27 // pred_region
          _
        $region40: #{tpu_custom_call.1} parent=27 // pred_fallthru
          _
      $region28: #{tpu_custom_call.1} parent=5 // pred_fallthru
        _
      %p320 = scmp.le.s32.totalorder 2, %s14
      // Predicated region
      $region41: #{tpu_custom_call.1} parent=5 // pred_check
        %p321 = pneg %p320
      $region42: #{tpu_custom_call.1} parent=5 // pred_check_branch
        %323 = sbr.rel (%p321) target = $region44
      $region43: #{tpu_custom_call.1} parent=5 // pred_region
        %s324 = ssub.s32 %s14, 2
        // Predicated region
        $region45: #{tpu_custom_call.1} parent=43 // pred_check
          %p325 = pneg %p113
        $region46: #{tpu_custom_call.1} parent=43 // pred_check_branch
          %327 = sbr.rel (%p325) target = $region48
        $region47: #{tpu_custom_call.1} parent=43 // pred_region
          %p328 = scmp.lt.s32.totalorder %s25, 1
          %s329 = scalar_select %p328, %s25, 1
          %p330 = scmp.lt.s32.totalorder %s26, 0
          %s331 = scalar_select %p330, %s26, 0
          %s332 = sadd.s32 %s331, %s329
          %s333 = scalar_lea.vmem %s2, %s332
        $region48: #{tpu_custom_call.1} parent=43 // pred_fallthru
          _
      $region44: #{tpu_custom_call.1} parent=5 // pred_fallthru
        _
    $region6: #{tpu_custom_call.1} parent=1 // loop_footer
      %s18 = sadd.s32 1, %s14
    $region7: #{tpu_custom_call.1} parent=1 // loop_footer_branch
      %13 = sbr.rel target = $region3
    $region8: #{tpu_custom_call.1} parent=1 // loop_exit
      _
    %334 = vsyncpa [#allocation3], 1
    %s335 = scalar_lea.sflag [#allocation3], 1
    %336 = vsyncpa %s335, 1
    %337 = vsyncpa [#allocation5], 1
    %s338 = scalar_lea.sflag [#allocation5], 1
    %339 = vsyncpa %s338, 1

</llo_original>
